<compile_context>
chip_gen: v7x
topology: tpu7x:2x2x1
jax: 0.10.0
libtpu: 0.0.40
codegen_flags: <defaults>
</compile_context>

<pallas_src>
import jax
import jax.numpy as jnp
from jax.experimental import pallas as pl
from jax.experimental.pallas import tpu as pltpu

N, CIN, H, W = 1, 6, 32, 32
COUT = 2
GROUPS = 2
CIN_G = CIN // GROUPS    # 3 input channels per group
COUT_G = COUT // GROUPS  # 1 output channel per group


def conv1x1_relu_kernel(w_ref, b_ref, x_ref, o_ref):
    # w_ref: (COUT*CIN_G,) f32 in SMEM (row-major flatten of (COUT, CIN_G))
    # b_ref: (COUT,)       f32 in SMEM
    # x_ref: (CIN, HW)     f32 in VMEM
    # o_ref: (COUT, HW)    f32 in VMEM
    x = x_ref[...]                       # (CIN, HW)
    hw = x.shape[1]
    rows = []
    for oc in range(COUT):
        g = oc // COUT_G                 # which input-channel group feeds this output
        acc = jnp.full((1, hw), b_ref[oc], dtype=jnp.float32)
        for c in range(CIN_G):
            ic = g * CIN_G + c
            acc = acc + w_ref[oc * CIN_G + c] * x[ic:ic + 1, :]
        rows.append(jnp.maximum(acc, 0.0))
    o_ref[...] = jnp.concatenate(rows, axis=0).astype(o_ref.dtype)


def conv1x1_grouped_relu(x_nchw, weight, bias):
    """x_nchw: (N, CIN, H, W); weight: (COUT, CIN_G, 1, 1); bias: (COUT,)."""
    n, cin, h, w = x_nchw.shape
    assert cin == CIN
    hw = n * h * w

    # NCHW -> (CIN, N*H*W). For N == 1 this is a pure reshape (no transpose op).
    if n == 1:
        x_cm = x_nchw.reshape(cin, hw)
    else:
        x_cm = jnp.transpose(x_nchw, (1, 0, 2, 3)).reshape(cin, hw)

    w_flat = weight.reshape(COUT * CIN_G).astype(jnp.float32)  # (6,)
    b_flat = bias.reshape(COUT).astype(jnp.float32)            # (2,)

    out_cm = pl.pallas_call(
        conv1x1_relu_kernel,
        out_shape=jax.ShapeDtypeStruct((COUT, hw), x_nchw.dtype),
        in_specs=[
            pl.BlockSpec(memory_space=pltpu.MemorySpace.SMEM),  # weights (scalars)
            pl.BlockSpec(memory_space=pltpu.MemorySpace.SMEM),  # bias (scalars)
            pl.BlockSpec(memory_space=pltpu.MemorySpace.VMEM),  # x, whole array
        ],
        out_specs=pl.BlockSpec(memory_space=pltpu.MemorySpace.VMEM),
    )(w_flat, b_flat, x_cm)

    # (COUT, N*H*W) -> NCHW. Pure reshape for N == 1.
    if n == 1:
        return out_cm.reshape(n, COUT, h, w)
    return jnp.transpose(out_cm.reshape(COUT, n, h, w), (1, 0, 2, 3))


def reference(x_nchw, weight, bias):
    # Pure-JAX reference of grouped 1x1 conv + relu (for sanity check).
    outs = []
    for g in range(GROUPS):
        xg = x_nchw[:, g * CIN_G:(g + 1) * CIN_G]            # (N, Cin_g, H, W)
        wg = weight[g * COUT_G:(g + 1) * COUT_G, :, 0, 0]     # (Cout_g, Cin_g)
        og = jnp.einsum('nchw,oc->nohw', xg, wg) + bias[
            g * COUT_G:(g + 1) * COUT_G].reshape(1, -1, 1, 1)
        outs.append(og)
    return jnp.maximum(jnp.concatenate(outs, axis=1), 0.0)


if __name__ == "__main__":
    key = jax.random.PRNGKey(0)
    kx, kw, kb = jax.random.split(key, 3)

    x1 = jax.random.normal(kx, (N, CIN, H, W), dtype=jnp.float32)
    # Conv2d(6, 2, 1, groups=2) params: weight (2, 3, 1, 1), bias (2,)
    weight = jax.random.normal(kw, (COUT, CIN_G, 1, 1), dtype=jnp.float32) * 0.1
    bias = jax.random.normal(kb, (COUT,), dtype=jnp.float32) * 0.1

    out = conv1x1_grouped_relu(x1, weight, bias)
    jax.block_until_ready(out)

    ref = reference(x1, weight, bias)
    assert out.shape == (N, COUT, H, W)
    assert jnp.allclose(out, ref, atol=1e-5), "mismatch vs reference"

    print("KERNEL_OK")
</pallas_src>

<mosaic_0001>
module attributes {stable_mosaic.version = 11 : i64} {
  func.func @conv1x1_relu_kernel(%arg0: memref<6xf32, #tpu.memory_space<smem>>, %arg1: memref<2xf32, #tpu.memory_space<smem>>, %arg2: memref<6x1024xf32, #tpu.memory_space<vmem>>, %arg3: memref<2x1024xf32, #tpu.memory_space<vmem>>) attributes {dimension_semantics = [], scalar_prefetch = 0 : i64, scratch_operands = 0 : i64, tpu.core_type = #tpu.core_type<tc>} {
    %c0 = arith.constant 0 : index
    %c0_0 = arith.constant 0 : index
    %0 = vector.load %arg2[%c0, %c0_0] : memref<6x1024xf32, #tpu.memory_space<vmem>>, vector<6x1024xf32>
    %c0_1 = arith.constant 0 : index
    %1 = memref.load %arg1[%c0_1] : memref<2xf32, #tpu.memory_space<smem>>
    %2 = vector.broadcast %1 : f32 to vector<1x1024xf32>
    %c0_2 = arith.constant 0 : index
    %3 = memref.load %arg0[%c0_2] : memref<6xf32, #tpu.memory_space<smem>>
    %4 = vector.extract_strided_slice %0 {offsets = [0, 0], sizes = [1, 1024], strides = [1, 1]} : vector<6x1024xf32> to vector<1x1024xf32>
    %5 = vector.broadcast %3 : f32 to vector<1x1024xf32>
    %6 = arith.mulf %5, %4 : vector<1x1024xf32>
    %7 = arith.addf %2, %6 : vector<1x1024xf32>
    %c1 = arith.constant 1 : index
    %8 = memref.load %arg0[%c1] : memref<6xf32, #tpu.memory_space<smem>>
    %9 = vector.extract_strided_slice %0 {offsets = [1, 0], sizes = [1, 1024], strides = [1, 1]} : vector<6x1024xf32> to vector<1x1024xf32>
    %10 = vector.broadcast %8 : f32 to vector<1x1024xf32>
    %11 = arith.mulf %10, %9 : vector<1x1024xf32>
    %12 = arith.addf %7, %11 : vector<1x1024xf32>
    %c2 = arith.constant 2 : index
    %13 = memref.load %arg0[%c2] : memref<6xf32, #tpu.memory_space<smem>>
    %14 = vector.extract_strided_slice %0 {offsets = [2, 0], sizes = [1, 1024], strides = [1, 1]} : vector<6x1024xf32> to vector<1x1024xf32>
    %15 = vector.broadcast %13 : f32 to vector<1x1024xf32>
    %16 = arith.mulf %15, %14 : vector<1x1024xf32>
    %17 = arith.addf %12, %16 : vector<1x1024xf32>
    %cst = arith.constant 0.000000e+00 : f32
    %18 = vector.broadcast %cst : f32 to vector<1x1024xf32>
    %19 = arith.maximumf %17, %18 : vector<1x1024xf32>
    %c1_3 = arith.constant 1 : index
    %20 = memref.load %arg1[%c1_3] : memref<2xf32, #tpu.memory_space<smem>>
    %21 = vector.broadcast %20 : f32 to vector<1x1024xf32>
    %c3 = arith.constant 3 : index
    %22 = memref.load %arg0[%c3] : memref<6xf32, #tpu.memory_space<smem>>
    %23 = vector.extract_strided_slice %0 {offsets = [3, 0], sizes = [1, 1024], strides = [1, 1]} : vector<6x1024xf32> to vector<1x1024xf32>
    %24 = vector.broadcast %22 : f32 to vector<1x1024xf32>
    %25 = arith.mulf %24, %23 : vector<1x1024xf32>
    %26 = arith.addf %21, %25 : vector<1x1024xf32>
    %c4 = arith.constant 4 : index
    %27 = memref.load %arg0[%c4] : memref<6xf32, #tpu.memory_space<smem>>
    %28 = vector.extract_strided_slice %0 {offsets = [4, 0], sizes = [1, 1024], strides = [1, 1]} : vector<6x1024xf32> to vector<1x1024xf32>
    %29 = vector.broadcast %27 : f32 to vector<1x1024xf32>
    %30 = arith.mulf %29, %28 : vector<1x1024xf32>
    %31 = arith.addf %26, %30 : vector<1x1024xf32>
    %c5 = arith.constant 5 : index
    %32 = memref.load %arg0[%c5] : memref<6xf32, #tpu.memory_space<smem>>
    %33 = vector.extract_strided_slice %0 {offsets = [5, 0], sizes = [1, 1024], strides = [1, 1]} : vector<6x1024xf32> to vector<1x1024xf32>
    %34 = vector.broadcast %32 : f32 to vector<1x1024xf32>
    %35 = arith.mulf %34, %33 : vector<1x1024xf32>
    %36 = arith.addf %31, %35 : vector<1x1024xf32>
    %cst_4 = arith.constant 0.000000e+00 : f32
    %37 = vector.broadcast %cst_4 : f32 to vector<1x1024xf32>
    %38 = arith.maximumf %36, %37 : vector<1x1024xf32>
    %39 = tpu.concatenate %19, %38 in 0 : vector<1x1024xf32>, vector<1x1024xf32> -> vector<2x1024xf32>
    %c0_5 = arith.constant 0 : index
    %c0_6 = arith.constant 0 : index
    %40 = vector.load %arg3[%c0_5, %c0_6] : memref<2x1024xf32, #tpu.memory_space<vmem>>, vector<2x1024xf32>
    tpu.vector_store %arg3[%c0_5, %c0_6], %39 {strides = array<i32>} : memref<2x1024xf32, #tpu.memory_space<vmem>>, vector<2x1024xf32>,
    return
  }
}

</mosaic_0001>

<llo_original>
// kernel: tpu_custom_call.1
$region0: #{tpu_custom_call.1}
  #allocation0 [shape = 'u32[]', space=smem, size = 0x4, offset = 0x4, fixed_abs, tag = 'smem constant byte address 0x4 - core index']
  #allocation1 [shape = 'u32[144,128]{1,0:T(1,128)}', space=vmem, size = 0x12000, scoped, tag = 'internal scratch']
  %s0 = inlined_call_operand.hbm [shape: f32[6], index: 0, kind: input, shape index: {}]
  %s1 = inlined_call_operand.vmem [shape: f32[2], index: 1, kind: input, shape index: {}]
  %s2 = inlined_call_operand.hbm [shape: f32[6,1024], index: 2, kind: input, shape index: {}]
  %s3 = inlined_call_operand.hbm [shape: f32[2,1024], index: 3, kind: output, shape index: {}]
  %s4 = sld [smem:[#allocation0]]
  $region34: #{tpu_custom_call.1} parent=0
    _
  %s6 = ssub.s32 1, %s4
  %s7 = scalar_select 0, %s6, %s4
  $region1: #{tpu_custom_call.1} parent=0
    #allocation2 [shape = 'u8[512]{0}', space=smem, size = 0x200, scoped, tag = 'input window, operand 0, single buffered']
    #allocation3 [shape = 's32[1]{0}', space=sflag, size = 0x4, scoped, tag = 'scoped memory for tpu_custom_call.1']
    #allocation4 [shape = 's32[1]{0}', space=sflag, size = 0x4, scoped, tag = 'scoped memory for tpu_custom_call.1']
    #allocation5 [shape = 's32[1]{0}', space=sflag, size = 0x4, scoped, tag = 'scoped memory for tpu_custom_call.1']
    #allocation6 [shape = 's32[1]{0}', space=sflag, size = 0x4, scoped, tag = 'scoped memory for tpu_custom_call.1']
    #allocation7 [shape = 'u8[512]{0}', space=smem, size = 0x200, scoped, tag = 'input window, operand 1, single buffered']
    #allocation8 [shape = 'u8[32768]{0}', space=vmem, size = 0x8000, scoped, tag = 'input window, operand 2, single buffered']
    #allocation9 [shape = 'u8[8192]{0}', space=vmem, size = 0x2000, scoped, tag = 'output window, operand 0, single buffered']
    %8 = vsyncpa [#allocation5], 0
    %9 = vsyncpa [#allocation6], 0
    %10 = vsyncpa [#allocation3], 0
    %11 = vsyncpa [#allocation4], 0
    // Predicated region
    $region2: #{tpu_custom_call.1} parent=1 // pred_check
      _
    $region3: #{tpu_custom_call.1} parent=1 // pred_check_branch
      %13 = sbr.rel (0) target = $region5
    $region4: #{tpu_custom_call.1} parent=1 // pred_region
      %s15 = ssub.s32 16, 16
      %16 = vsyncadd [#allocation5], %s15
      %19 = dma.hbm_to_smem %s0, 16, [#allocation2], [#allocation5]
    $region5: #{tpu_custom_call.1} parent=1 // pred_fallthru
      _
    // Predicated region
    $region6: #{tpu_custom_call.1} parent=1 // pred_check
      _
    $region7: #{tpu_custom_call.1} parent=1 // pred_check_branch
      %21 = sbr.rel (0) target = $region9
    $region8: #{tpu_custom_call.1} parent=1 // pred_region
      %s23 = ssub.s32 16, 16
      %24 = vsyncadd [#allocation6], %s23
      %s26 = sshll.u32 %s1, 4
      %s27 = int_to_ptr.vmem [resolvable:$true] %s26
      %29 = dma.vmem_to_smem %s27, 16, [#allocation7], [#allocation6]
    $region9: #{tpu_custom_call.1} parent=1 // pred_fallthru
      _
    // Predicated region
    $region10: #{tpu_custom_call.1} parent=1 // pred_check
      _
    $region11: #{tpu_custom_call.1} parent=1 // pred_check_branch
      %31 = sbr.rel (0) target = $region13
    $region12: #{tpu_custom_call.1} parent=1 // pred_region
      %s33 = ssub.s32 1024, 1024
      %34 = vsyncadd [#allocation3], %s33
      %s36 = sshll.u32 [#allocation8], 4
      %s37 = int_to_ptr.vmem [resolvable:$true] %s36
      %39 = dma.hbm_to_vmem [thread:$0]  %s2, 1024, %s37, [#allocation3]
    $region13: #{tpu_custom_call.1} parent=1 // pred_fallthru
      _
    // Predicated region
    $region14: #{tpu_custom_call.1} parent=1 // pred_check
      _
    $region15: #{tpu_custom_call.1} parent=1 // pred_check_branch
      %41 = sbr.rel (0) target = $region17
    $region16: #{tpu_custom_call.1} parent=1 // pred_region
      %42 = dma.done [#allocation5], 16
    $region17: #{tpu_custom_call.1} parent=1 // pred_fallthru
      _
    // Predicated region
    $region18: #{tpu_custom_call.1} parent=1 // pred_check
      _
    $region19: #{tpu_custom_call.1} parent=1 // pred_check_branch
      %44 = sbr.rel (0) target = $region21
    $region20: #{tpu_custom_call.1} parent=1 // pred_region
      %45 = dma.done [#allocation6], 16
    $region21: #{tpu_custom_call.1} parent=1 // pred_fallthru
      _
    // Predicated region
    $region22: #{tpu_custom_call.1} parent=1 // pred_check
      _
    $region23: #{tpu_custom_call.1} parent=1 // pred_check_branch
      %47 = sbr.rel (0) target = $region25
    $region24: #{tpu_custom_call.1} parent=1 // pred_region
      %48 = dma.done [#allocation3], 1024
    $region25: #{tpu_custom_call.1} parent=1 // pred_fallthru
      _
    %49 = sfence
    %v50 = vld [vmem:[#allocation8] sm:$0x3f]
    %v51 = vld [vmem:[#allocation8 + $0x8] sm:$0x3f]
    %v52 = vld [vmem:[#allocation8 + $0x10] sm:$0x3f]
    %v53 = vld [vmem:[#allocation8 + $0x18] sm:$0x3f]
    %v54 = vld [vmem:[#allocation8 + $0x20] sm:$0x3f]
    %v55 = vld [vmem:[#allocation8 + $0x28] sm:$0x3f]
    %v56 = vld [vmem:[#allocation8 + $0x30] sm:$0x3f]
    %v57 = vld [vmem:[#allocation8 + $0x38] sm:$0x3f]
    %s58 = sld [smem:[#allocation7]]
    %v59 = vstv %s58
    %s60 = sld [smem:[#allocation2]]
    %v61 = vstv %s60
    %v62 = vmul.f32 %v61, %v50
    %v63 = vmul.f32 %v61, %v51
    %v64 = vmul.f32 %v61, %v52
    %v65 = vmul.f32 %v61, %v53
    %v66 = vmul.f32 %v61, %v54
    %v67 = vmul.f32 %v61, %v55
    %v68 = vmul.f32 %v61, %v56
    %v69 = vmul.f32 %v61, %v57
    %v70 = vadd.f32 %v59, %v62
    %v71 = vadd.f32 %v59, %v63
    %v72 = vadd.f32 %v59, %v64
    %v73 = vadd.f32 %v59, %v65
    %v74 = vadd.f32 %v59, %v66
    %v75 = vadd.f32 %v59, %v67
    %v76 = vadd.f32 %v59, %v68
    %v77 = vadd.f32 %v59, %v69
    %s78 = sld [smem:[#allocation2 + $0x1]]
    %v79 = vstv %s78
    %v80 = vmul.f32 %v79, %v50
    %v81 = vmul.f32 %v79, %v51
    %v82 = vmul.f32 %v79, %v52
    %v83 = vmul.f32 %v79, %v53
    %v84 = vmul.f32 %v79, %v54
    %v85 = vmul.f32 %v79, %v55
    %v86 = vmul.f32 %v79, %v56
    %v87 = vmul.f32 %v79, %v57
    %v96 = vrot.slane %v80, 1
    %v97 = vrot.slane %v81, 1
    %v98 = vrot.slane %v82, 1
    %v99 = vrot.slane %v83, 1
    %v100 = vrot.slane %v84, 1
    %v101 = vrot.slane %v85, 1
    %v102 = vrot.slane %v86, 1
    %v103 = vrot.slane %v87, 1
    %v112 = vadd.f32 %v70, %v96
    %v113 = vadd.f32 %v71, %v97
    %v114 = vadd.f32 %v72, %v98
    %v115 = vadd.f32 %v73, %v99
    %v116 = vadd.f32 %v74, %v100
    %v117 = vadd.f32 %v75, %v101
    %v118 = vadd.f32 %v76, %v102
    %v119 = vadd.f32 %v77, %v103
    %s120 = sld [smem:[#allocation2 + $0x2]]
    %v121 = vstv %s120
    %v122 = vmul.f32 %v121, %v50
    %v123 = vmul.f32 %v121, %v51
    %v124 = vmul.f32 %v121, %v52
    %v125 = vmul.f32 %v121, %v53
    %v126 = vmul.f32 %v121, %v54
    %v127 = vmul.f32 %v121, %v55
    %v128 = vmul.f32 %v121, %v56
    %v129 = vmul.f32 %v121, %v57
    %v138 = vrot.slane %v122, 2
    %v139 = vrot.slane %v123, 2
    %v140 = vrot.slane %v124, 2
    %v141 = vrot.slane %v125, 2
    %v142 = vrot.slane %v126, 2
    %v143 = vrot.slane %v127, 2
    %v144 = vrot.slane %v128, 2
    %v145 = vrot.slane %v129, 2
    %v154 = vadd.f32 %v112, %v138
    %v155 = vadd.f32 %v113, %v139
    %v156 = vadd.f32 %v114, %v140
    %v157 = vadd.f32 %v115, %v141
    %v158 = vadd.f32 %v116, %v142
    %v159 = vadd.f32 %v117, %v143
    %v160 = vadd.f32 %v118, %v144
    %v161 = vadd.f32 %v119, %v145
    %v162 = vmax.f32 %v154, 0.0
    %v163 = vmax.f32 %v155, 0.0
    %v164 = vmax.f32 %v156, 0.0
    %v165 = vmax.f32 %v157, 0.0
    %v166 = vmax.f32 %v158, 0.0
    %v167 = vmax.f32 %v159, 0.0
    %v168 = vmax.f32 %v160, 0.0
    %v169 = vmax.f32 %v161, 0.0
    %s170 = sld [smem:[#allocation7 + $0x1]]
    %v171 = vstv %s170
    %s172 = sld [smem:[#allocation2 + $0x3]]
    %v173 = vstv %s172
    %v174 = vmul.f32 %v173, %v50
    %v175 = vmul.f32 %v173, %v51
    %v176 = vmul.f32 %v173, %v52
    %v177 = vmul.f32 %v173, %v53
    %v178 = vmul.f32 %v173, %v54
    %v179 = vmul.f32 %v173, %v55
    %v180 = vmul.f32 %v173, %v56
    %v181 = vmul.f32 %v173, %v57
    %v182 = vadd.f32 %v171, %v174
    %v183 = vadd.f32 %v171, %v175
    %v184 = vadd.f32 %v171, %v176
    %v185 = vadd.f32 %v171, %v177
    %v186 = vadd.f32 %v171, %v178
    %v187 = vadd.f32 %v171, %v179
    %v188 = vadd.f32 %v171, %v180
    %v189 = vadd.f32 %v171, %v181
    %s190 = sld [smem:[#allocation2 + $0x4]]
    %v191 = vstv %s190
    %v192 = vmul.f32 %v191, %v50
    %v193 = vmul.f32 %v191, %v51
    %v194 = vmul.f32 %v191, %v52
    %v195 = vmul.f32 %v191, %v53
    %v196 = vmul.f32 %v191, %v54
    %v197 = vmul.f32 %v191, %v55
    %v198 = vmul.f32 %v191, %v56
    %v199 = vmul.f32 %v191, %v57
    %v208 = vrot.slane %v192, 1
    %v209 = vrot.slane %v193, 1
    %v210 = vrot.slane %v194, 1
    %v211 = vrot.slane %v195, 1
    %v212 = vrot.slane %v196, 1
    %v213 = vrot.slane %v197, 1
    %v214 = vrot.slane %v198, 1
    %v215 = vrot.slane %v199, 1
    %v224 = vadd.f32 %v182, %v208
    %v225 = vadd.f32 %v183, %v209
    %v226 = vadd.f32 %v184, %v210
    %v227 = vadd.f32 %v185, %v211
    %v228 = vadd.f32 %v186, %v212
    %v229 = vadd.f32 %v187, %v213
    %v230 = vadd.f32 %v188, %v214
    %v231 = vadd.f32 %v189, %v215
    %s232 = sld [smem:[#allocation2 + $0x5]]
    %v233 = vstv %s232
    %v234 = vmul.f32 %v233, %v50
    %v235 = vmul.f32 %v233, %v51
    %v236 = vmul.f32 %v233, %v52
    %v237 = vmul.f32 %v233, %v53
    %v238 = vmul.f32 %v233, %v54
    %v239 = vmul.f32 %v233, %v55
    %v240 = vmul.f32 %v233, %v56
    %v241 = vmul.f32 %v233, %v57
    %v250 = vrot.slane %v234, 2
    %v251 = vrot.slane %v235, 2
    %v252 = vrot.slane %v236, 2
    %v253 = vrot.slane %v237, 2
    %v254 = vrot.slane %v238, 2
    %v255 = vrot.slane %v239, 2
    %v256 = vrot.slane %v240, 2
    %v257 = vrot.slane %v241, 2
    %v266 = vadd.f32 %v224, %v250
    %v267 = vadd.f32 %v225, %v251
    %v268 = vadd.f32 %v226, %v252
    %v269 = vadd.f32 %v227, %v253
    %v270 = vadd.f32 %v228, %v254
    %v271 = vadd.f32 %v229, %v255
    %v272 = vadd.f32 %v230, %v256
    %v273 = vadd.f32 %v231, %v257
    %v274 = vmax.f32 %v266, 0.0
    %v275 = vmax.f32 %v267, 0.0
    %v276 = vmax.f32 %v268, 0.0
    %v277 = vmax.f32 %v269, 0.0
    %v278 = vmax.f32 %v270, 0.0
    %v279 = vmax.f32 %v271, 0.0
    %v280 = vmax.f32 %v272, 0.0
    %v281 = vmax.f32 %v273, 0.0
    %v290 = vrot.slane %v274, 2
    %v291 = vrot.slane %v275, 2
    %v292 = vrot.slane %v276, 2
    %v293 = vrot.slane %v277, 2
    %v294 = vrot.slane %v278, 2
    %v295 = vrot.slane %v279, 2
    %v296 = vrot.slane %v280, 2
    %v297 = vrot.slane %v281, 2
    %vm306 = vcmask 1040384
    %v307 = vsel %vm306, %v162, %v290
    %v308 = vsel %vm306, %v163, %v291
    %v309 = vsel %vm306, %v164, %v292
    %v310 = vsel %vm306, %v165, %v293
    %v311 = vsel %vm306, %v166, %v294
    %v312 = vsel %vm306, %v167, %v295
    %v313 = vsel %vm306, %v168, %v296
    %v314 = vsel %vm306, %v169, %v297
    %v323 = vcombine.low %v307, %v308
    %v324 = vcombine.low %v309, %v310
    %v326 = vunpack.c.l.s4 1983009808
    %v327 = vunpack.c.0.s8 %v326
    %v328 = vlaneseq
    %v329 = vshrl.u32 %v328, 7
    %v330 = vsub.s32 %v327, %v329
    %v331 = vrot.slane %v323, %v330
    %v333 = vunpack.c.l.s4 1983009808
    %v334 = vunpack.c.0.s8 %v333
    %v335 = vlaneseq
    %v336 = vshrl.u32 %v335, 7
    %v337 = vsub.s32 %v334, %v336
    %v338 = vrot.slane %v324, %v337
    %v339 = vcombine.low %v331, %v338
    %v340 = vcombine.low %v311, %v312
    %v341 = vcombine.low %v313, %v314
    %v343 = vunpack.c.l.s4 1983009808
    %v344 = vunpack.c.0.s8 %v343
    %v345 = vlaneseq
    %v346 = vshrl.u32 %v345, 7
    %v347 = vsub.s32 %v344, %v346
    %v348 = vrot.slane %v340, %v347
    %v350 = vunpack.c.l.s4 1983009808
    %v351 = vunpack.c.0.s8 %v350
    %v352 = vlaneseq
    %v353 = vshrl.u32 %v352, 7
    %v354 = vsub.s32 %v351, %v353
    %v355 = vrot.slane %v341, %v354
    %v356 = vcombine.low %v348, %v355
    %359 = vst [vmem:[#allocation9] sm:$0xff] %v339
    %360 = vst [vmem:[#allocation9 + $0x8] sm:$0xff] %v356
    // Predicated region
    $region26: #{tpu_custom_call.1} parent=1 // pred_check
      _
    $region27: #{tpu_custom_call.1} parent=1 // pred_check_branch
      %362 = sbr.rel (0) target = $region29
    $region28: #{tpu_custom_call.1} parent=1 // pred_region
      %s364 = ssub.s32 256, 256
      %365 = vsyncadd [#allocation4], %s364
      %s367 = sshll.u32 [#allocation9], 4
      %s368 = int_to_ptr.vmem [resolvable:$true] %s367
      %370 = dma.vmem_to_hbm [thread:$0]  %s368, 256, %s3, [#allocation4]
    $region29: #{tpu_custom_call.1} parent=1 // pred_fallthru
      _
    // Predicated region
    $region30: #{tpu_custom_call.1} parent=1 // pred_check
      _
    $region31: #{tpu_custom_call.1} parent=1 // pred_check_branch
      %372 = sbr.rel (0) target = $region33
    $region32: #{tpu_custom_call.1} parent=1 // pred_region
      %373 = dma.done [#allocation4], 256
    $region33: #{tpu_custom_call.1} parent=1 // pred_fallthru
      _
    %374 = vsyncpa [#allocation3], 1
    %375 = vsyncpa [#allocation4], 1
    %376 = vsyncpa [#allocation5], 1
    %377 = vsyncpa [#allocation6], 1

</llo_original>
